<compile_context>
chip_gen: v5e
topology: v5e:2x2
jax: 0.10.0
libtpu: 0.0.40
codegen_flags: <defaults>
</compile_context>

<pallas_src>
import jax
import jax.numpy as jnp
from jax import lax
from jax.experimental import pallas as pl
from jax.experimental.pallas import tpu as pltpu


def _graph_embedding_kernel(x_ref, w_ref, o_ref):
    # x_ref: (1, I, TS) native layout; w_ref: (I, E); o_ref: (1, TS, E)
    x = x_ref[0]                                    # (I, TS)
    out = lax.dot_general(                          # contract over I -> (TS, E)
        x,
        w_ref[...],
        dimension_numbers=(((0,), (0,)), ((), ())),
        preferred_element_type=jnp.float32,
    )
    o_ref[0] = out.astype(o_ref.dtype)


def _pick_seq_tile(seq_len):
    # Largest lane-friendly tile that exactly divides seq_len; otherwise take
    # the whole axis (full-dim blocks are always layout-legal).
    for cand in (512, 256, 128):
        if seq_len >= cand and seq_len % cand == 0:
            return cand
    return seq_len


def graph_embedding_forward(inputs, embedding):
    """inputs: (B, input_size, seq_len), embedding: (input_size, E)
       returns (B, seq_len, E) float32 — same math as the PyTorch loop."""
    B, I, S = inputs.shape
    I_w, E = embedding.shape
    assert I == I_w

    x = inputs.astype(jnp.float32)      # native (B, I, S) layout, no transpose
    w = embedding.astype(jnp.float32)

    TS = _pick_seq_tile(S)
    grid = (B, S // TS)

    # Explicit VMEM budget: double-buffered x/out/weight blocks with 2x margin,
    # clamped to <= 48 MiB so the same tiling also fits v7x's 64 MiB VMEM.
    blk_bytes = 4 * (I * TS + I * E + TS * E)
    vmem_bytes = int(min(max(4 * blk_bytes, 16 << 20), 48 << 20))

    out = pl.pallas_call(
        _graph_embedding_kernel,
        out_shape=jax.ShapeDtypeStruct((B, S, E), jnp.float32),
        grid_spec=pltpu.PrefetchScalarGridSpec(
            num_scalar_prefetch=0,
            grid=grid,
            in_specs=[
                # x read in its native layout: block (1, I, TS)
                pl.BlockSpec((1, I, TS), lambda b, s: (b, 0, s)),
                # weight is tiny and constant across the grid -> stays resident
                pl.BlockSpec((I, E), lambda b, s: (0, 0)),
            ],
            out_specs=pl.BlockSpec((1, TS, E), lambda b, s: (b, s, 0)),
        ),
        compiler_params=pltpu.CompilerParams(
            dimension_semantics=("parallel", "parallel"),
            vmem_limit_bytes=vmem_bytes,
        ),
    )(x, w)
    return out


def reference_forward(inputs, embedding):
    # pure-JAX reference of the PyTorch loop
    return jnp.einsum("bis,ie->bse", inputs.astype(jnp.float32), embedding)


if __name__ == "__main__":
    # small shapes consistent with the module:
    # batch=2, input_size=4 (node feature dim), seq_len=16,
    # embedding_size=128 (the module's default, lane-dense output).
    B, I, S, E = 2, 4, 16, 128

    key = jax.random.PRNGKey(0)
    k_in, k_w = jax.random.split(key)

    inputs = jax.random.normal(k_in, (B, I, S), dtype=jnp.float32)

    # deterministic init matching nn.Parameter.uniform_(-1/sqrt(E), 1/sqrt(E))
    bound = 1.0 / (E ** 0.5)
    embedding = jax.random.uniform(
        k_w, (I, E), dtype=jnp.float32, minval=-bound, maxval=bound
    )

    out = graph_embedding_forward(inputs, embedding)
    out = jax.block_until_ready(out)

    ref = reference_forward(inputs, embedding)
    assert out.shape == (B, S, E)
    assert jnp.allclose(out, ref, atol=1e-5, rtol=1e-5)

    print("KERNEL_OK")
</pallas_src>

<mosaic_0001>
module attributes {stable_mosaic.version = 11 : i64} {
  func.func @_graph_embedding_kernel(%arg0: i32, %arg1: i32, %arg2: memref<1x4x16xf32, #tpu.memory_space<vmem>>, %arg3: memref<4x128xf32, #tpu.memory_space<vmem>>, %arg4: memref<1x16x128xf32, #tpu.memory_space<vmem>>) attributes {dimension_semantics = [#tpu.dimension_semantics<parallel>, #tpu.dimension_semantics<parallel>], iteration_bounds = array<i64: 2, 1>, scalar_prefetch = 0 : i64, scratch_operands = 0 : i64, tpu.core_type = #tpu.core_type<tc>, window_params = [{transform_indices = @transform_0, window_bounds = array<i64: 1, 4, 16>}, {pipeline_mode = #tpu.pipeline_mode<synchronous>, transform_indices = @transform_1, window_bounds = array<i64: 4, 128>}, {transform_indices = @transform_2, window_bounds = array<i64: 1, 16, 128>}]} {
    %c0 = arith.constant 0 : index
    %c0_0 = arith.constant 0 : index
    %c0_1 = arith.constant 0 : index
    %0 = vector.load %arg2[%c0, %c0_0, %c0_1] : memref<1x4x16xf32, #tpu.memory_space<vmem>>, vector<1x4x16xf32>
    %1 = vector.shape_cast %0 : vector<1x4x16xf32> to vector<4x16xf32>
    %c0_2 = arith.constant 0 : index
    %c0_3 = arith.constant 0 : index
    %2 = vector.load %arg3[%c0_2, %c0_3] : memref<4x128xf32, #tpu.memory_space<vmem>>, vector<4x128xf32>
    %cst = arith.constant dense<0.000000e+00> : vector<16x128xf32>
    %3 = tpu.matmul %1, %2, %cst {dimension_numbers = #tpu.dot_dimension_numbers<[0], [0], [1], [1], [0, 1, 1, 1], [], []>} : vector<4x16xf32>, vector<4x128xf32>, vector<16x128xf32> -> vector<16x128xf32>
    %c0_4 = arith.constant 0 : index
    %c0_5 = arith.constant 0 : index
    %c0_6 = arith.constant 0 : index
    %4 = vector.load %arg4[%c0_4, %c0_5, %c0_6] : memref<1x16x128xf32, #tpu.memory_space<vmem>>, vector<1x16x128xf32>
    %5 = vector.shape_cast %4 : vector<1x16x128xf32> to vector<16x128xf32>
    %6 = vector.shape_cast %3 : vector<16x128xf32> to vector<1x16x128xf32>
    tpu.vector_store %arg4[%c0_4, %c0_5, %c0_6], %6 {strides = array<i32>} : memref<1x16x128xf32, #tpu.memory_space<vmem>>, vector<1x16x128xf32>,
    return
  }
  func.func @transform_0(%arg0: i32, %arg1: i32) -> (i32, i32, i32) {
    %c0_i32 = arith.constant 0 : i32
    %c0_i32_0 = arith.constant 0 : i32
    return %arg0, %c0_i32, %arg1 : i32, i32, i32
  }
  func.func @transform_1(%arg0: i32, %arg1: i32) -> (i32, i32) {
    %c0_i32 = arith.constant 0 : i32
    %c0_i32_0 = arith.constant 0 : i32
    %c0_i32_1 = arith.constant 0 : i32
    return %c0_i32, %c0_i32_0 : i32, i32
  }
  func.func @transform_2(%arg0: i32, %arg1: i32) -> (i32, i32, i32) {
    %c0_i32 = arith.constant 0 : i32
    %c0_i32_0 = arith.constant 0 : i32
    return %arg0, %arg1, %c0_i32 : i32, i32, i32
  }
}

</mosaic_0001>

<llo_original>
// kernel: tpu_custom_call.1
$region0: #{tpu_custom_call.1}
  #allocation0 [shape = 'u32[]', space=smem, size = 0x4, offset = 0x4, fixed_abs, tag = 'smem constant byte address 0x4 - core index']
  #allocation1 [shape = 'u32[72,128]{1,0:T(1,128)}', space=vmem, size = 0x9000, scoped, tag = 'internal scratch']
  %s0 = inlined_call_operand.hbm [shape: f32[2,4,16], index: 0, kind: input, shape index: {}]
  %s1 = inlined_call_operand.hbm [shape: f32[4,128], index: 1, kind: input, shape index: {}]
  %s2 = inlined_call_operand.hbm [shape: f32[2,16,128], index: 2, kind: output, shape index: {}]
  %s3 = sld [smem:[#allocation0]]
  $region49: #{tpu_custom_call.1} parent=0
    _
  %s5 = ssub.s32 1, %s3
  %s6 = scalar_select 0, %s5, %s3
  $region1: #{tpu_custom_call.1} parent=0
    #allocation2 [shape = 'u8[4096]{0}', space=vmem, size = 0x1000, scoped, tag = 'input window, operand 0']
    #allocation3 [shape = 's32[2]{0}', space=sflag, size = 0x8, scoped, tag = 'scoped memory for tpu_custom_call.1']
    #allocation4 [shape = 's32[2]{0}', space=sflag, size = 0x8, scoped, tag = 'scoped memory for tpu_custom_call.1']
    #allocation5 [shape = 'u8[2048]{0}', space=vmem, size = 0x800, scoped, tag = 'input window, operand 1, single buffered']
    #allocation6 [shape = 's32[1]{0}', space=sflag, size = 0x4, scoped, tag = 'scoped memory for tpu_custom_call.1']
    #allocation7 [shape = 'u8[16384]{0}', space=vmem, size = 0x4000, scoped, tag = 'output window, operand 0']
    %7 = vsyncpa [#allocation3], 0
    %s8 = scalar_lea.sflag [#allocation3], 1
    %9 = vsyncpa %s8, 0
    %10 = vsyncpa [#allocation6], 0
    %11 = vsyncpa [#allocation4], 0
    %s12 = scalar_lea.sflag [#allocation4], 1
    %13 = vsyncpa %s12, 0
    loop: start=0, step=1, limit=4
    $region2: #{tpu_custom_call.1} parent=1 // loop_pre_header
      _
    $region3: #{tpu_custom_call.1} parent=1 // loop_header
      %s15 = sphi 0, %s19
      %p16 = scmp.ge.s32.totalorder %s15, 4
      %s22 = sphi 0, %s34
      %s23 = sphi 0, %s30
      %s24 = sphi 0, %s22
      %s25 = sphi 0, %s23
      %s26 = sphi 0, %s24
      %s27 = sphi 0, %s25
      %s39 = sphi 0, %s41
      %s42 = sphi 0, %s39
      %s43 = sphi 0, %s42
      %s59 = sphi 0, %s43
      %s63 = sphi 0, %s63
      %s65 = sphi 0, %s63
      %s66 = sphi 0, %s65
      %s80 = sphi 0, %s66
      %s88 = sphi 0, %s90
      %s91 = sphi 0, %s88
      %s92 = sphi 0, %s91
      %s108 = sphi 0, %s92
    $region4: #{tpu_custom_call.1} parent=1 // loop_header_branch
      %18 = sbr.rel (%p16) target = $region8
    $region5: #{tpu_custom_call.1} parent=1 // loop_body
      %s20 = ssub.s32 %s15, 1
      %s21 = ssub.s32 %s15, 2
      %s28 = sadd.s32 1, %s23
      %p29 = scmp.ge.s32.totalorder %s28, 1
      %s30 = scalar_select %p29, 0, %s28
      %s31 = sadd.s32 1, %s22
      %s32 = scalar_select %p29, %s31, %s22
      %p33 = scmp.ge.s32.totalorder %s32, 2
      %s34 = scalar_select %p33, 0, %s32
      %s35 = ssub.s32 %s22, %s34
      %s36 = ssub.s32 %s23, %s30
      %s37 = sor.u32 %s35, %s36
      %p38 = scmp.eq.s32.totalorder %s37, 0
      %s40 = sadd.s32 %s39, 1
      %s41 = scalar_select %p38, %s39, %s40
      %p44 = pneg %p38
      %p45 = scmp.eq.s32.totalorder %s15, 1
      %p46 = por %p44, %p45
      %p47 = scmp.ne.s32.totalorder %s39, %s42
      %p48 = scmp.eq.s32.totalorder %s15, 0
      %p49 = por %p47, %p48
      %p50 = scmp.ne.s32.totalorder %s39, %s42
      %p51 = scmp.eq.s32.totalorder %s20, 1
      %p52 = por %p50, %p51
      %p53 = scmp.ne.s32.totalorder %s42, %s43
      %p54 = scmp.eq.s32.totalorder %s20, 0
      %p55 = por %p53, %p54
      %p56 = scmp.ne.s32.totalorder %s42, %s43
      %p57 = scmp.eq.s32.totalorder %s21, 1
      %p58 = por %p56, %p57
      %p60 = scmp.ne.s32.totalorder %s43, %s59
      %p61 = scmp.eq.s32.totalorder %s21, 0
      %p62 = por %p60, %p61
      %s64 = sadd.s32 %s63, 1
      %p67 = scmp.eq.s32.totalorder %s15, 1
      %p68 = scmp.ne.s32.totalorder %s63, %s65
      %p69 = scmp.eq.s32.totalorder %s15, 0
      %p70 = por %p68, %p69
      %p71 = scmp.ne.s32.totalorder %s63, %s65
      %p72 = scmp.eq.s32.totalorder %s20, 1
      %p73 = por %p71, %p72
      %p74 = scmp.ne.s32.totalorder %s65, %s66
      %p75 = scmp.eq.s32.totalorder %s20, 0
      %p76 = por %p74, %p75
      %p77 = scmp.ne.s32.totalorder %s65, %s66
      %p78 = scmp.eq.s32.totalorder %s21, 1
      %p79 = por %p77, %p78
      %p81 = scmp.ne.s32.totalorder %s66, %s80
      %p82 = scmp.eq.s32.totalorder %s21, 0
      %p83 = por %p81, %p82
      %s84 = ssub.s32 %s22, %s34
      %s85 = ssub.s32 %s23, %s30
      %s86 = sor.u32 %s84, %s85
      %p87 = scmp.eq.s32.totalorder %s86, 0
      %s89 = sadd.s32 %s88, 1
      %s90 = scalar_select %p87, %s88, %s89
      %p93 = pneg %p87
      %p94 = scmp.eq.s32.totalorder %s15, 1
      %p95 = por %p93, %p94
      %p96 = scmp.ne.s32.totalorder %s88, %s91
      %p97 = scmp.eq.s32.totalorder %s15, 0
      %p98 = por %p96, %p97
      %p99 = scmp.ne.s32.totalorder %s88, %s91
      %p100 = scmp.eq.s32.totalorder %s20, 1
      %p101 = por %p99, %p100
      %p102 = scmp.ne.s32.totalorder %s91, %s92
      %p103 = scmp.eq.s32.totalorder %s20, 0
      %p104 = por %p102, %p103
      %p105 = scmp.ne.s32.totalorder %s91, %s92
      %p106 = scmp.eq.s32.totalorder %s21, 1
      %p107 = por %p105, %p106
      %p109 = scmp.ne.s32.totalorder %s92, %s108
      %p110 = scmp.eq.s32.totalorder %s21, 0
      %p111 = por %p109, %p110
      %p112 = scmp.le.s32.totalorder 1, %s15
      %p113 = scmp.lt.s32.totalorder %s15, 3
      %p114 = pnand %p112, %p113
      %p115 = pneg %p114
      // Predicated region
      $region9: #{tpu_custom_call.1} parent=5 // pred_check
        _
      $region10: #{tpu_custom_call.1} parent=5 // pred_check_branch
        %117 = sbr.rel (%p114) target = $region12
      $region11: #{tpu_custom_call.1} parent=5 // pred_region
        %s118 = ssub.s32 %s15, 1
        // Predicated region
        $region13: #{tpu_custom_call.1} parent=11 // pred_check
          %p119 = pneg %p76
        $region14: #{tpu_custom_call.1} parent=11 // pred_check_branch
          %121 = sbr.rel (%p119) target = $region16
        $region15: #{tpu_custom_call.1} parent=11 // pred_region
          %123 = vsyncadd [#allocation6], 0
          %s125 = sshll.u32 %s1, 4
          %s126 = int_to_ptr.hbm [resolvable:$true] %s125
          %s127 = sshll.u32 [#allocation5], 4
          %s128 = int_to_ptr.vmem [resolvable:$true] %s127
          %130 = dma.hbm_to_vmem [thread:$0]  %s126, 64, %s128, [#allocation6]
        $region16: #{tpu_custom_call.1} parent=11 // pred_fallthru
          _
      $region12: #{tpu_custom_call.1} parent=5 // pred_fallthru
        _
      %p131 = scmp.lt.s32.totalorder %s15, 2
      // Predicated region
      $region17: #{tpu_custom_call.1} parent=5 // pred_check
        %p132 = pneg %p131
      $region18: #{tpu_custom_call.1} parent=5 // pred_check_branch
        %134 = sbr.rel (%p132) target = $region20
      $region19: #{tpu_custom_call.1} parent=5 // pred_region
        // Predicated region
        $region21: #{tpu_custom_call.1} parent=19 // pred_check
          %p135 = pneg %p49
        $region22: #{tpu_custom_call.1} parent=19 // pred_check_branch
          %137 = sbr.rel (%p135) target = $region24
        $region23: #{tpu_custom_call.1} parent=19 // pred_region
          %s138 = sand.u32 %s39, 1
          %s139 = scalar_lea.sflag [#allocation3], %s138
          %s140 = sand.u32 %s39, 1
          %s141 = smul.addr %s140, 4
          %s142 = scalar_lea.vmem [#allocation2], %s141
          %144 = vsyncadd %s139, 0
          %s145 = sadd.s32 %s23, %s22
          %s146 = smul.addr %s145, 4
          %s147 = scalar_lea.hbm %s0, %s146
          %s149 = sshll.u32 %s147, 4
          %s150 = int_to_ptr.hbm [resolvable:$true] %s149
          %s151 = sshll.u32 %s142, 4
          %s152 = int_to_ptr.vmem [resolvable:$true] %s151
          %154 = dma.hbm_to_vmem [thread:$0]  %s150, 64, %s152, %s139
        $region24: #{tpu_custom_call.1} parent=19 // pred_fallthru
          _
      $region20: #{tpu_custom_call.1} parent=5 // pred_fallthru
        _
      %p155 = scmp.le.s32.totalorder 1, %s15
      %p156 = scmp.lt.s32.totalorder %s15, 3
      %p157 = pnand %p155, %p156
      %p158 = pneg %p157
      // Predicated region
      $region25: #{tpu_custom_call.1} parent=5 // pred_check
        _
      $region26: #{tpu_custom_call.1} parent=5 // pred_check_branch
        %160 = sbr.rel (%p157) target = $region28
      $region27: #{tpu_custom_call.1} parent=5 // pred_region
        %s161 = ssub.s32 %s15, 1
        %s162 = sand.u32 %s42, 1
        %s163 = scalar_lea.sflag [#allocation3], %s162
        %s164 = sand.u32 %s42, 1
        %s165 = smul.addr %s164, 4
        %s166 = scalar_lea.vmem [#allocation2], %s165
        // Predicated region
        $region29: #{tpu_custom_call.1} parent=27 // pred_check
          %p167 = pneg %p55
        $region30: #{tpu_custom_call.1} parent=27 // pred_check_branch
          %169 = sbr.rel (%p167) target = $region32
        $region31: #{tpu_custom_call.1} parent=27 // pred_region
          %171 = dma.done %s163, 64
        $region32: #{tpu_custom_call.1} parent=27 // pred_fallthru
          _
        // Predicated region
        $region33: #{tpu_custom_call.1} parent=27 // pred_check
          %p172 = pneg %p76
        $region34: #{tpu_custom_call.1} parent=27 // pred_check_branch
          %174 = sbr.rel (%p172) target = $region36
        $region35: #{tpu_custom_call.1} parent=27 // pred_region
          %176 = dma.done [#allocation6], 64
        $region36: #{tpu_custom_call.1} parent=27 // pred_fallthru
          _
        %s177 = sand.u32 %s42, 1
        %s178 = scalar_lea.sflag [#allocation3], %s177
        %s179 = sand.u32 %s42, 1
        %s180 = smul.addr %s179, 4
        %s181 = scalar_lea.vmem [#allocation2], %s180
        %p182 = pneg %p55
        %p183 = pneg %p52
        %p184 = pneg %p76
        %p185 = pneg %p73
        %p186 = pneg %p104
        %p187 = pneg %p101
        %s188 = sand.u32 %s91, 1
        %s189 = scalar_lea.sflag [#allocation4], %s188
        %s190 = sand.u32 %s91, 1
        %s191 = smul.addr %s190, 16
        %s192 = scalar_lea.vmem [#allocation7], %s191
        %s193 = smul.u32 2, %s25
        %v194 = vld [vmem:[%s166] sm:$0xf]
        %v195 = vld [vmem:[#allocation5] sm:$0xf]
        %196 = vxpose.xlu0.b32.start [1/16] %v194, 128
        %197 = vxpose.xlu0.b32.cont [2/16] 0.0, 128
        %198 = vxpose.xlu0.b32.cont [3/16] 0.0, 128
        %199 = vxpose.xlu0.b32.cont [4/16] 0.0, 128
        %200 = vxpose.xlu0.b32.cont [5/16] 0.0, 128
        %201 = vxpose.xlu0.b32.cont [6/16] 0.0, 128
        %202 = vxpose.xlu0.b32.cont [7/16] 0.0, 128
        %203 = vxpose.xlu0.b32.cont [8/16] 0.0, 128
        %204 = vxpose.xlu0.b32.cont [9/16] 0.0, 128
        %205 = vxpose.xlu0.b32.cont [10/16] 0.0, 128
        %206 = vxpose.xlu0.b32.cont [11/16] 0.0, 128
        %207 = vxpose.xlu0.b32.cont [12/16] 0.0, 128
        %208 = vxpose.xlu0.b32.cont [13/16] 0.0, 128
        %209 = vxpose.xlu0.b32.cont [14/16] 0.0, 128
        %210 = vxpose.xlu0.b32.cont [15/16] 0.0, 128
        %211 = vxpose.xlu0.b32.end [16/16] 0.0, 128
        %v212 = vpop.trf.xlu0
        %v213 = vpop.trf.xlu0
        %v214 = vpop.trf.xlu0
        %v215 = vpop.trf.xlu0
        %v216 = vpop.trf.xlu0
        %v217 = vpop.trf.xlu0
        %v218 = vpop.trf.xlu0
        %v219 = vpop.trf.xlu0
        %v220 = vpop.trf.xlu0
        %v221 = vpop.trf.xlu0
        %v222 = vpop.trf.xlu0
        %v223 = vpop.trf.xlu0
        %v224 = vpop.trf.xlu0
        %v225 = vpop.trf.xlu0
        %v226 = vpop.trf.xlu0
        %v227 = vpop.trf.xlu0
        %vm228 = vcmask 31744
        %v230 = vsel %vm228, %v212, 0
        %v233 = vsel %vm228, %v213, 0
        %vm235 = vcmask 1043456
        %v237 = vsel %vm235, %v195, 0
        %239 = vmatpush.msra.mxu0 0.0
        %240 = vmatpush.msra.mxu0 0.0
        %241 = vmatpush.msra.mxu0 0.0
        %242 = vmatpush.msra.mxu0 0.0
        %243 = vmatpush.msra.mxu0 0.0
        %244 = vmatpush.msra.mxu0 0.0
        %245 = vmatpush.msra.mxu0 0.0
        %246 = vmatpush.msra.mxu0 0.0
        %247 = vmatpush.msra.mxu0 0.0
        %248 = vmatpush.msra.mxu0 0.0
        %249 = vmatpush.msra.mxu0 0.0
        %250 = vmatpush.msra.mxu0 0.0
        %251 = vmatpush.msra.mxu0 0.0
        %252 = vmatpush.msra.mxu0 0.0
        %253 = vmatpush.msra.mxu0 0.0
        %254 = vmatpush.msra.mxu0 %v237
        %255 = vmatmul.f32.gmra.mxu0 %v230
        %v256 = vpop.f32.mrf.mxu0
        %v257 = vadd.f32 0.0, %v256
        %258 = vmatmul.f32.gmra.mxu0 %v233
        %v259 = vpop.f32.mrf.mxu0
        %v260 = vadd.f32 0.0, %v259
        %261 = vdwg.mxu0
        %262 = vst [vmem:[%s192] sm:$0xff] %v257
        %263 = vst [vmem:[%s192 + $0x8] sm:$0xff] %v260
        %s264 = sand.u32 %s91, 1
        %s265 = scalar_lea.sflag [#allocation4], %s264
        %s266 = sand.u32 %s91, 1
        %s267 = smul.addr %s266, 16
        %s268 = scalar_lea.vmem [#allocation7], %s267
        // Predicated region
        $region37: #{tpu_custom_call.1} parent=27 // pred_check
          %p269 = pneg %p101
        $region38: #{tpu_custom_call.1} parent=27 // pred_check_branch
          %271 = sbr.rel (%p269) target = $region40
        $region39: #{tpu_custom_call.1} parent=27 // pred_region
          %s272 = smul.u32 2, %s25
          %274 = vsyncadd %s265, 0
          %s275 = smul.addr %s24, 2
          %s276 = sadd.s32 %s272, %s275
          %s277 = smul.addr %s276, 8
          %s278 = scalar_lea.hbm %s2, %s277
          %s279 = sshll.u32 %s268, 4
          %s280 = int_to_ptr.vmem [resolvable:$true] %s279
          %s281 = sshll.u32 %s278, 4
          %s282 = int_to_ptr.hbm [resolvable:$true] %s281
          %287 = dma.vmem_to_hbm [thread:$0]  %s280, 256, %s282, %s265, 128, 128, 8
        $region40: #{tpu_custom_call.1} parent=27 // pred_fallthru
          _
      $region28: #{tpu_custom_call.1} parent=5 // pred_fallthru
        _
      %p288 = scmp.le.s32.totalorder 2, %s15
      // Predicated region
      $region41: #{tpu_custom_call.1} parent=5 // pred_check
        %p289 = pneg %p288
      $region42: #{tpu_custom_call.1} parent=5 // pred_check_branch
        %291 = sbr.rel (%p289) target = $region44
      $region43: #{tpu_custom_call.1} parent=5 // pred_region
        %s292 = ssub.s32 %s15, 2
        // Predicated region
        $region45: #{tpu_custom_call.1} parent=43 // pred_check
          %p293 = pneg %p107
        $region46: #{tpu_custom_call.1} parent=43 // pred_check_branch
          %295 = sbr.rel (%p293) target = $region48
        $region47: #{tpu_custom_call.1} parent=43 // pred_region
          %s296 = sand.u32 %s92, 1
          %s297 = scalar_lea.sflag [#allocation4], %s296
          %s298 = sand.u32 %s92, 1
          %s299 = smul.addr %s298, 16
          %s300 = scalar_lea.vmem [#allocation7], %s299
          %302 = dma.done %s297, 256
        $region48: #{tpu_custom_call.1} parent=43 // pred_fallthru
          _
      $region44: #{tpu_custom_call.1} parent=5 // pred_fallthru
        _
    $region6: #{tpu_custom_call.1} parent=1 // loop_footer
      %s19 = sadd.s32 1, %s15
    $region7: #{tpu_custom_call.1} parent=1 // loop_footer_branch
      %14 = sbr.rel target = $region3
    $region8: #{tpu_custom_call.1} parent=1 // loop_exit
      _
    %303 = vsyncpa [#allocation3], 1
    %s304 = scalar_lea.sflag [#allocation3], 1
    %305 = vsyncpa %s304, 1
    %306 = vsyncpa [#allocation6], 1
    %307 = vsyncpa [#allocation4], 1
    %s308 = scalar_lea.sflag [#allocation4], 1
    %309 = vsyncpa %s308, 1

</llo_original>
